<compile_context>
chip_gen: v5e
topology: v5e:2x2
jax: 0.10.0
libtpu: 0.0.40
codegen_flags: <defaults>
</compile_context>

<pallas_src>
import functools

import jax
import jax.numpy as jnp
from jax import lax
from jax.experimental import pallas as pl
from jax.experimental.pallas import tpu as pltpu


LANE = 128      # lane width: feature dims padded to this
TILE_M = 128    # node-row tile (output rows)
TILE_K = 128    # node-column tile (aggregation / reduction axis)


def _round_up(x, m):
    return (x + m - 1) // m * m


# -------------------- kernel 1: P = relu((A @ X) @ W1 + b1) @ W2 --------------------
def gcn_layer1_kernel(a_ref, x_ref, w1_ref, b1_ref, w2_ref, p_ref, acc_ref):
    k = pl.program_id(1)

    @pl.when(k == 0)
    def _():
        acc_ref[...] = jnp.zeros_like(acc_ref)

    # A row-block [TM, TK] @ X block [TK, C]  (bf16 in, f32 accumulate)
    acc_ref[...] += jnp.dot(a_ref[...], x_ref[...],
                            preferred_element_type=jnp.float32)

    @pl.when(k == pl.num_programs(1) - 1)
    def _():
        h = jnp.dot(acc_ref[...].astype(jnp.bfloat16), w1_ref[...],
                    preferred_element_type=jnp.float32)
        h = jnp.maximum(h + b1_ref[...], 0.0)                      # bias + ReLU (f32)
        p = jnp.dot(h.astype(jnp.bfloat16), w2_ref[...],
                    preferred_element_type=jnp.float32)
        p_ref[...] = p.astype(p_ref.dtype)


# ---------- kernel 2: out = log_softmax(A @ P + b2) over the valid lanes ------------
def gcn_layer2_kernel(a_ref, p_ref, b2_ref, o_ref, acc_ref, *, out_channels):
    k = pl.program_id(1)

    @pl.when(k == 0)
    def _():
        acc_ref[...] = jnp.zeros_like(acc_ref)

    acc_ref[...] += jnp.dot(a_ref[...], p_ref[...],
                            preferred_element_type=jnp.float32)

    @pl.when(k == pl.num_programs(1) - 1)
    def _():
        z = acc_ref[...] + b2_ref[...]                              # [TM, O_pad] f32
        lanes = lax.broadcasted_iota(jnp.int32, z.shape, 1)
        valid = lanes < out_channels                                # mask padded lanes
        z = jnp.where(valid, z, jnp.float32(-1e30))
        m = jnp.max(z, axis=1, keepdims=True)
        shifted = z - m
        lse = jnp.log(jnp.sum(jnp.where(valid, jnp.exp(shifted), 0.0),
                              axis=1, keepdims=True))
        o_ref[...] = (shifted - lse).astype(o_ref.dtype)


# ------------------------------------ JAX glue --------------------------------------
def build_normalized_adjacency(edge_index, num_nodes):
    """Dense D^{-1/2} (A + I) D^{-1/2}, matching PyG GCNConv defaults.

    Uses scatter-ADD so duplicate edges are counted (like PyG's scatter_add).
    Built ONCE per graph; do not call inside the per-forward hot path.
    """
    src = edge_index[0]
    dst = edge_index[1]
    a = jnp.zeros((num_nodes, num_nodes), dtype=jnp.float32)
    a = a.at[dst, src].add(1.0)                    # messages flow source -> target
    a = a + jnp.eye(num_nodes, dtype=jnp.float32)  # self loops
    deg = jnp.sum(a, axis=1)
    d_inv_sqrt = jnp.where(deg > 0, 1.0 / jnp.sqrt(deg), 0.0)
    return a * d_inv_sqrt[:, None] * d_inv_sqrt[None, :]


@functools.partial(jax.jit, static_argnames=("out_channels",))
def gcn_forward(a_hat, x, w1, b1, w2, b2, *, out_channels):
    n, c = x.shape
    h = w1.shape[1]

    n_pad = _round_up(max(n, TILE_M), TILE_M)
    c_pad = _round_up(c, LANE)
    h_pad = _round_up(h, LANE)
    o_pad = _round_up(out_channels, LANE)

    # Zero-pad to MXU/lane-friendly shapes (zero padding is mathematically inert:
    # padded A rows/cols contribute nothing to valid outputs, padded hidden units
    # are exactly zero after ReLU, padded output lanes are masked in log_softmax).
    a_p = jnp.zeros((n_pad, n_pad), jnp.bfloat16).at[:n, :n].set(
        a_hat.astype(jnp.bfloat16))
    x_p = jnp.zeros((n_pad, c_pad), jnp.bfloat16).at[:n, :c].set(
        x.astype(jnp.bfloat16))
    w1_p = jnp.zeros((c_pad, h_pad), jnp.bfloat16).at[:c, :h].set(
        w1.astype(jnp.bfloat16))
    b1_p = jnp.zeros((1, h_pad), jnp.float32).at[:, :h].set(b1.reshape(1, -1))
    w2_p = jnp.zeros((h_pad, o_pad), jnp.bfloat16).at[:h, :out_channels].set(
        w2.astype(jnp.bfloat16))
    b2_p = jnp.zeros((1, o_pad), jnp.float32).at[:, :out_channels].set(
        b2.reshape(1, -1))

    m_blocks = n_pad // TILE_M
    k_blocks = n_pad // TILE_K

    cparams = pltpu.CompilerParams(
        dimension_semantics=("parallel", "arbitrary"),
        vmem_limit_bytes=32 * 1024 * 1024,   # safe on v5e/v6e (128 MiB) and v7x (64 MiB)
    )

    # ---- layer 1 (fused with the layer-2 feature projection W2) ----
    p = pl.pallas_call(
        gcn_layer1_kernel,
        out_shape=jax.ShapeDtypeStruct((n_pad, o_pad), jnp.bfloat16),
        grid_spec=pltpu.PrefetchScalarGridSpec(
            num_scalar_prefetch=0,
            grid=(m_blocks, k_blocks),
            in_specs=[
                pl.BlockSpec((TILE_M, TILE_K), lambda i, k: (i, k)),   # A_hat
                pl.BlockSpec((TILE_K, c_pad), lambda i, k: (k, 0)),    # X
                pl.BlockSpec((c_pad, h_pad), lambda i, k: (0, 0)),     # W1
                pl.BlockSpec((1, h_pad), lambda i, k: (0, 0)),         # b1
                pl.BlockSpec((h_pad, o_pad), lambda i, k: (0, 0)),     # W2
            ],
            out_specs=pl.BlockSpec((TILE_M, o_pad), lambda i, k: (i, 0)),
            scratch_shapes=[pltpu.VMEM((TILE_M, c_pad), jnp.float32)],
        ),
        compiler_params=cparams,
    )(a_p, x_p, w1_p, b1_p, w2_p)

    # ---- layer 2: aggregation + bias + masked log_softmax ----
    out_p = pl.pallas_call(
        functools.partial(gcn_layer2_kernel, out_channels=out_channels),
        out_shape=jax.ShapeDtypeStruct((n_pad, o_pad), jnp.float32),
        grid_spec=pltpu.PrefetchScalarGridSpec(
            num_scalar_prefetch=0,
            grid=(m_blocks, k_blocks),
            in_specs=[
                pl.BlockSpec((TILE_M, TILE_K), lambda i, k: (i, k)),   # A_hat
                pl.BlockSpec((TILE_K, o_pad), lambda i, k: (k, 0)),    # P
                pl.BlockSpec((1, o_pad), lambda i, k: (0, 0)),         # b2
            ],
            out_specs=pl.BlockSpec((TILE_M, o_pad), lambda i, k: (i, 0)),
            scratch_shapes=[pltpu.VMEM((TILE_M, o_pad), jnp.float32)],
        ),
        compiler_params=cparams,
    )(a_p, p, b2_p)

    return out_p[:n, :out_channels]


def init_params(key, in_channels, hidden_channels, out_channels):
    """Deterministic Glorot-uniform weights + zero biases (GCNConv defaults)."""
    k1, k2 = jax.random.split(key)

    def glorot(k, fan_in, fan_out):
        limit = jnp.sqrt(6.0 / (fan_in + fan_out))
        return jax.random.uniform(k, (fan_in, fan_out), jnp.float32, -limit, limit)

    w1 = glorot(k1, in_channels, hidden_channels)
    b1 = jnp.zeros((hidden_channels,), jnp.float32)
    w2 = glorot(k2, hidden_channels, out_channels)
    b2 = jnp.zeros((out_channels,), jnp.float32)
    return (w1, b1, w2, b2)


def gcn_reference(a_hat, x, w1, b1, w2, b2):
    h = jnp.maximum(a_hat @ (x @ w1) + b1[None, :], 0.0)
    z = a_hat @ (h @ w2) + b2[None, :]
    return jax.nn.log_softmax(z, axis=1)


# --------------------------------------- main ---------------------------------------
if __name__ == "__main__":
    key = jax.random.PRNGKey(0)
    k_x, k_e, k_p = jax.random.split(key, 3)

    num_nodes = 16
    in_channels = 8
    hidden_channels = 32
    out_channels = 8
    num_edges = 40

    x = jax.random.normal(k_x, (num_nodes, in_channels), dtype=jnp.float32)
    edge_index = jax.random.randint(k_e, (2, num_edges), 0, num_nodes, dtype=jnp.int32)

    w1, b1, w2, b2 = init_params(k_p, in_channels, hidden_channels, out_channels)

    # Adjacency precomputed once per graph (not rebuilt every forward).
    a_hat = build_normalized_adjacency(edge_index, num_nodes)

    out = gcn_forward(a_hat, x, w1, b1, w2, b2, out_channels=out_channels)
    jax.block_until_ready(out)

    assert out.shape == (num_nodes, out_channels)
    # log_softmax rows should exponentiate-sum to 1
    row_sums = jnp.sum(jnp.exp(out), axis=1)
    assert jnp.allclose(row_sums, 1.0, atol=1e-4), row_sums
    # match the f32 reference (bf16 MXU operands -> lenient tolerance)
    ref = gcn_reference(a_hat, x, w1, b1, w2, b2)
    assert jnp.max(jnp.abs(out - ref)) < 0.1, jnp.max(jnp.abs(out - ref))

    print("KERNEL_OK")
</pallas_src>

<mosaic_0001>
module attributes {stable_mosaic.version = 11 : i64} {
  func.func @gcn_layer1_kernel(%arg0: i32, %arg1: i32, %arg2: memref<128x128xbf16, #tpu.memory_space<vmem>>, %arg3: memref<128x128xbf16, #tpu.memory_space<vmem>>, %arg4: memref<128x128xbf16, #tpu.memory_space<vmem>>, %arg5: memref<1x128xf32, #tpu.memory_space<vmem>>, %arg6: memref<128x128xbf16, #tpu.memory_space<vmem>>, %arg7: memref<128x128xbf16, #tpu.memory_space<vmem>>, %arg8: memref<128x128xf32, #tpu.memory_space<vmem>>) attributes {dimension_semantics = [#tpu.dimension_semantics<parallel>, #tpu.dimension_semantics<arbitrary>], iteration_bounds = array<i64: 1, 1>, scalar_prefetch = 0 : i64, scratch_operands = 1 : i64, tpu.core_type = #tpu.core_type<tc>, window_params = [{transform_indices = @transform_0, window_bounds = array<i64: 128, 128>}, {transform_indices = @transform_1, window_bounds = array<i64: 128, 128>}, {pipeline_mode = #tpu.pipeline_mode<synchronous>, transform_indices = @transform_2, window_bounds = array<i64: 128, 128>}, {pipeline_mode = #tpu.pipeline_mode<synchronous>, transform_indices = @transform_3, window_bounds = array<i64: 1, 128>}, {pipeline_mode = #tpu.pipeline_mode<synchronous>, transform_indices = @transform_4, window_bounds = array<i64: 128, 128>}, {transform_indices = @transform_5, window_bounds = array<i64: 128, 128>}]} {
    %c0_i32 = arith.constant 0 : i32
    %0 = arith.cmpi eq, %arg1, %c0_i32 : i32
    %1 = arith.extui %0 : i1 to i32
    %c0_i32_0 = arith.constant 0 : i32
    %2 = arith.cmpi ne, %1, %c0_i32_0 : i32
    scf.if %2 {
      %cst_10 = arith.constant 0.000000e+00 : f32
      %12 = vector.broadcast %cst_10 : f32 to vector<128x128xf32>
      %c0_11 = arith.constant 0 : index
      %c0_12 = arith.constant 0 : index
      %13 = vector.load %arg8[%c0_11, %c0_12] : memref<128x128xf32, #tpu.memory_space<vmem>>, vector<128x128xf32>
      tpu.vector_store %arg8[%c0_11, %c0_12], %12 {strides = array<i32>} : memref<128x128xf32, #tpu.memory_space<vmem>>, vector<128x128xf32>,
    } else {
    }
    %c0 = arith.constant 0 : index
    %c0_1 = arith.constant 0 : index
    %3 = vector.load %arg8[%c0, %c0_1] : memref<128x128xf32, #tpu.memory_space<vmem>>, vector<128x128xf32>
    %c0_2 = arith.constant 0 : index
    %c0_3 = arith.constant 0 : index
    %4 = vector.load %arg2[%c0_2, %c0_3] : memref<128x128xbf16, #tpu.memory_space<vmem>>, vector<128x128xbf16>
    %c0_4 = arith.constant 0 : index
    %c0_5 = arith.constant 0 : index
    %5 = vector.load %arg3[%c0_4, %c0_5] : memref<128x128xbf16, #tpu.memory_space<vmem>>, vector<128x128xbf16>
    %cst = arith.constant dense<0.000000e+00> : vector<128x128xf32>
    %6 = tpu.matmul %4, %5, %cst {dimension_numbers = #tpu.dot_dimension_numbers<[1], [0], [0], [1], [0, 0, 1, 1], [], []>} : vector<128x128xbf16>, vector<128x128xbf16>, vector<128x128xf32> -> vector<128x128xf32>
    %7 = arith.addf %3, %6 : vector<128x128xf32>
    %c0_6 = arith.constant 0 : index
    %c0_7 = arith.constant 0 : index
    %8 = vector.load %arg8[%c0_6, %c0_7] : memref<128x128xf32, #tpu.memory_space<vmem>>, vector<128x128xf32>
    tpu.vector_store %arg8[%c0_6, %c0_7], %7 {strides = array<i32>} : memref<128x128xf32, #tpu.memory_space<vmem>>, vector<128x128xf32>,
    %c0_i32_8 = arith.constant 0 : i32
    %9 = arith.cmpi eq, %arg1, %c0_i32_8 : i32
    %10 = arith.extui %9 : i1 to i32
    %c0_i32_9 = arith.constant 0 : i32
    %11 = arith.cmpi ne, %10, %c0_i32_9 : i32
    scf.if %11 {
      %c0_10 = arith.constant 0 : index
      %c0_11 = arith.constant 0 : index
      %12 = vector.load %arg8[%c0_10, %c0_11] : memref<128x128xf32, #tpu.memory_space<vmem>>, vector<128x128xf32>
      %13 = arith.truncf %12 : vector<128x128xf32> to vector<128x128xbf16>
      %c0_12 = arith.constant 0 : index
      %c0_13 = arith.constant 0 : index
      %14 = vector.load %arg4[%c0_12, %c0_13] : memref<128x128xbf16, #tpu.memory_space<vmem>>, vector<128x128xbf16>
      %cst_14 = arith.constant dense<0.000000e+00> : vector<128x128xf32>
      %15 = tpu.matmul %13, %14, %cst_14 {dimension_numbers = #tpu.dot_dimension_numbers<[1], [0], [0], [1], [0, 0, 1, 1], [], []>} : vector<128x128xbf16>, vector<128x128xbf16>, vector<128x128xf32> -> vector<128x128xf32>
      %c0_15 = arith.constant 0 : index
      %c0_16 = arith.constant 0 : index
      %16 = vector.load %arg5[%c0_15, %c0_16] : memref<1x128xf32, #tpu.memory_space<vmem>>, vector<1x128xf32>
      %17 = vector.broadcast %16 : vector<1x128xf32> to vector<128x128xf32>
      %18 = arith.addf %15, %17 : vector<128x128xf32>
      %cst_17 = arith.constant 0.000000e+00 : f32
      %19 = vector.broadcast %cst_17 : f32 to vector<128x128xf32>
      %20 = arith.maximumf %18, %19 : vector<128x128xf32>
      %21 = arith.truncf %20 : vector<128x128xf32> to vector<128x128xbf16>
      %c0_18 = arith.constant 0 : index
      %c0_19 = arith.constant 0 : index
      %22 = vector.load %arg6[%c0_18, %c0_19] : memref<128x128xbf16, #tpu.memory_space<vmem>>, vector<128x128xbf16>
      %cst_20 = arith.constant dense<0.000000e+00> : vector<128x128xf32>
      %23 = tpu.matmul %21, %22, %cst_20 {dimension_numbers = #tpu.dot_dimension_numbers<[1], [0], [0], [1], [0, 0, 1, 1], [], []>} : vector<128x128xbf16>, vector<128x128xbf16>, vector<128x128xf32> -> vector<128x128xf32>
      %24 = arith.truncf %23 : vector<128x128xf32> to vector<128x128xbf16>
      %c0_21 = arith.constant 0 : index
      %c0_22 = arith.constant 0 : index
      %25 = vector.load %arg7[%c0_21, %c0_22] : memref<128x128xbf16, #tpu.memory_space<vmem>>, vector<128x128xbf16>
      tpu.vector_store %arg7[%c0_21, %c0_22], %24 {strides = array<i32>} : memref<128x128xbf16, #tpu.memory_space<vmem>>, vector<128x128xbf16>,
    } else {
    }
    return
  }
  func.func @transform_0(%arg0: i32, %arg1: i32) -> (i32, i32) {
    %c0_i32 = arith.constant 0 : i32
    return %arg0, %arg1 : i32, i32
  }
  func.func @transform_1(%arg0: i32, %arg1: i32) -> (i32, i32) {
    %c0_i32 = arith.constant 0 : i32
    %c0_i32_0 = arith.constant 0 : i32
    return %arg1, %c0_i32 : i32, i32
  }
  func.func @transform_2(%arg0: i32, %arg1: i32) -> (i32, i32) {
    %c0_i32 = arith.constant 0 : i32
    %c0_i32_0 = arith.constant 0 : i32
    %c0_i32_1 = arith.constant 0 : i32
    return %c0_i32, %c0_i32_0 : i32, i32
  }
  func.func @transform_3(%arg0: i32, %arg1: i32) -> (i32, i32) {
    %c0_i32 = arith.constant 0 : i32
    %c0_i32_0 = arith.constant 0 : i32
    %c0_i32_1 = arith.constant 0 : i32
    return %c0_i32, %c0_i32_0 : i32, i32
  }
  func.func @transform_4(%arg0: i32, %arg1: i32) -> (i32, i32) {
    %c0_i32 = arith.constant 0 : i32
    %c0_i32_0 = arith.constant 0 : i32
    %c0_i32_1 = arith.constant 0 : i32
    return %c0_i32, %c0_i32_0 : i32, i32
  }
  func.func @transform_5(%arg0: i32, %arg1: i32) -> (i32, i32) {
    %c0_i32 = arith.constant 0 : i32
    %c0_i32_0 = arith.constant 0 : i32
    return %arg0, %c0_i32 : i32, i32
  }
}

module attributes {stable_mosaic.version = 11 : i64} {
  func.func @gcn_layer2_kernel(%arg0: i32, %arg1: i32, %arg2: memref<128x128xbf16, #tpu.memory_space<vmem>>, %arg3: memref<128x128xbf16, #tpu.memory_space<vmem>>, %arg4: memref<1x128xf32, #tpu.memory_space<vmem>>, %arg5: memref<128x128xf32, #tpu.memory_space<vmem>>, %arg6: memref<128x128xf32, #tpu.memory_space<vmem>>) attributes {dimension_semantics = [#tpu.dimension_semantics<parallel>, #tpu.dimension_semantics<arbitrary>], iteration_bounds = array<i64: 1, 1>, scalar_prefetch = 0 : i64, scratch_operands = 1 : i64, tpu.core_type = #tpu.core_type<tc>, window_params = [{transform_indices = @transform_0, window_bounds = array<i64: 128, 128>}, {transform_indices = @transform_1, window_bounds = array<i64: 128, 128>}, {pipeline_mode = #tpu.pipeline_mode<synchronous>, transform_indices = @transform_2, window_bounds = array<i64: 1, 128>}, {transform_indices = @transform_3, window_bounds = array<i64: 128, 128>}]} {
    %c0_i32 = arith.constant 0 : i32
    %0 = arith.cmpi eq, %arg1, %c0_i32 : i32
    %1 = arith.extui %0 : i1 to i32
    %c0_i32_0 = arith.constant 0 : i32
    %2 = arith.cmpi ne, %1, %c0_i32_0 : i32
    scf.if %2 {
      %cst_10 = arith.constant 0.000000e+00 : f32
      %12 = vector.broadcast %cst_10 : f32 to vector<128x128xf32>
      %c0_11 = arith.constant 0 : index
      %c0_12 = arith.constant 0 : index
      %13 = vector.load %arg6[%c0_11, %c0_12] : memref<128x128xf32, #tpu.memory_space<vmem>>, vector<128x128xf32>
      tpu.vector_store %arg6[%c0_11, %c0_12], %12 {strides = array<i32>} : memref<128x128xf32, #tpu.memory_space<vmem>>, vector<128x128xf32>,
    } else {
    }
    %c0 = arith.constant 0 : index
    %c0_1 = arith.constant 0 : index
    %3 = vector.load %arg6[%c0, %c0_1] : memref<128x128xf32, #tpu.memory_space<vmem>>, vector<128x128xf32>
    %c0_2 = arith.constant 0 : index
    %c0_3 = arith.constant 0 : index
    %4 = vector.load %arg2[%c0_2, %c0_3] : memref<128x128xbf16, #tpu.memory_space<vmem>>, vector<128x128xbf16>
    %c0_4 = arith.constant 0 : index
    %c0_5 = arith.constant 0 : index
    %5 = vector.load %arg3[%c0_4, %c0_5] : memref<128x128xbf16, #tpu.memory_space<vmem>>, vector<128x128xbf16>
    %cst = arith.constant dense<0.000000e+00> : vector<128x128xf32>
    %6 = tpu.matmul %4, %5, %cst {dimension_numbers = #tpu.dot_dimension_numbers<[1], [0], [0], [1], [0, 0, 1, 1], [], []>} : vector<128x128xbf16>, vector<128x128xbf16>, vector<128x128xf32> -> vector<128x128xf32>
    %7 = arith.addf %3, %6 : vector<128x128xf32>
    %c0_6 = arith.constant 0 : index
    %c0_7 = arith.constant 0 : index
    %8 = vector.load %arg6[%c0_6, %c0_7] : memref<128x128xf32, #tpu.memory_space<vmem>>, vector<128x128xf32>
    tpu.vector_store %arg6[%c0_6, %c0_7], %7 {strides = array<i32>} : memref<128x128xf32, #tpu.memory_space<vmem>>, vector<128x128xf32>,
    %c0_i32_8 = arith.constant 0 : i32
    %9 = arith.cmpi eq, %arg1, %c0_i32_8 : i32
    %10 = arith.extui %9 : i1 to i32
    %c0_i32_9 = arith.constant 0 : i32
    %11 = arith.cmpi ne, %10, %c0_i32_9 : i32
    scf.if %11 {
      %c0_10 = arith.constant 0 : index
      %c0_11 = arith.constant 0 : index
      %12 = vector.load %arg6[%c0_10, %c0_11] : memref<128x128xf32, #tpu.memory_space<vmem>>, vector<128x128xf32>
      %c0_12 = arith.constant 0 : index
      %c0_13 = arith.constant 0 : index
      %13 = vector.load %arg4[%c0_12, %c0_13] : memref<1x128xf32, #tpu.memory_space<vmem>>, vector<1x128xf32>
      %14 = vector.broadcast %13 : vector<1x128xf32> to vector<128x128xf32>
      %15 = arith.addf %12, %14 : vector<128x128xf32>
      %16 = tpu.iota {dimensions = array<i32: 1>} : vector<128x128xi32>
      %c8_i32 = arith.constant 8 : i32
      %17 = vector.broadcast %c8_i32 : i32 to vector<128x128xi32>
      %18 = arith.cmpi slt, %16, %17 : vector<128x128xi32>
      %cst_14 = arith.constant -1.000000e+30 : f32
      %19 = vector.broadcast %cst_14 : f32 to vector<128x128xf32>
      %20 = arith.select %18, %15, %19 : vector<128x128xi1>, vector<128x128xf32>
      %cst_15 = arith.constant dense<0xFF800000> : vector<128xf32>
      %21 = vector.multi_reduction <maximumf>, %20, %cst_15 [1] : vector<128x128xf32> to vector<128xf32>
      %22 = vector.shape_cast %21 : vector<128xf32> to vector<128x1xf32>
      %23 = vector.broadcast %22 : vector<128x1xf32> to vector<128x128xf32>
      %24 = arith.subf %20, %23 : vector<128x128xf32>
      %25 = math.exp %24 : vector<128x128xf32>
      %cst_16 = arith.constant 0.000000e+00 : f32
      %26 = vector.broadcast %cst_16 : f32 to vector<128x128xf32>
      %27 = arith.select %18, %25, %26 : vector<128x128xi1>, vector<128x128xf32>
      %cst_17 = arith.constant dense<0.000000e+00> : vector<128xf32>
      %28 = vector.multi_reduction <add>, %27, %cst_17 [1] : vector<128x128xf32> to vector<128xf32>
      %29 = vector.shape_cast %28 : vector<128xf32> to vector<128x1xf32>
      %30 = math.log %29 : vector<128x1xf32>
      %31 = vector.broadcast %30 : vector<128x1xf32> to vector<128x128xf32>
      %32 = arith.subf %24, %31 : vector<128x128xf32>
      %c0_18 = arith.constant 0 : index
      %c0_19 = arith.constant 0 : index
      %33 = vector.load %arg5[%c0_18, %c0_19] : memref<128x128xf32, #tpu.memory_space<vmem>>, vector<128x128xf32>
      tpu.vector_store %arg5[%c0_18, %c0_19], %32 {strides = array<i32>} : memref<128x128xf32, #tpu.memory_space<vmem>>, vector<128x128xf32>,
    } else {
    }
    return
  }
  func.func @transform_0(%arg0: i32, %arg1: i32) -> (i32, i32) {
    %c0_i32 = arith.constant 0 : i32
    return %arg0, %arg1 : i32, i32
  }
  func.func @transform_1(%arg0: i32, %arg1: i32) -> (i32, i32) {
    %c0_i32 = arith.constant 0 : i32
    %c0_i32_0 = arith.constant 0 : i32
    return %arg1, %c0_i32 : i32, i32
  }
  func.func @transform_2(%arg0: i32, %arg1: i32) -> (i32, i32) {
    %c0_i32 = arith.constant 0 : i32
    %c0_i32_0 = arith.constant 0 : i32
    %c0_i32_1 = arith.constant 0 : i32
    return %c0_i32, %c0_i32_0 : i32, i32
  }
  func.func @transform_3(%arg0: i32, %arg1: i32) -> (i32, i32) {
    %c0_i32 = arith.constant 0 : i32
    %c0_i32_0 = arith.constant 0 : i32
    return %arg0, %c0_i32 : i32, i32
  }
}

</mosaic_0001>

<llo_original>
// kernel: gcn_forward.3
$region0: #{gcn_forward.3}
  #allocation0 [shape = 'u32[]', space=smem, size = 0x4, offset = 0x4, fixed_abs, tag = 'smem constant byte address 0x4 - core index']
  #allocation1 [shape = 'u32[72,128]{1,0:T(1,128)}', space=vmem, size = 0x9000, scoped, tag = 'internal scratch']
  #allocation2 [shape = 'f32[128,128]{1,0:T(8,128)}', space=vmem, size = 0x10000, scoped, tag = 'scratch operand']
  %s0 = inlined_call_operand.vmem [shape: bf16[128,128], index: 0, kind: input, shape index: {}]
  %s1 = inlined_call_operand.vmem [shape: bf16[128,128], index: 1, kind: input, shape index: {}]
  %s2 = inlined_call_operand.vmem [shape: f32[1,128], index: 2, kind: input, shape index: {}]
  %s3 = inlined_call_operand.vmem [shape: f32[128,128], index: 3, kind: output, shape index: {}]
  %s4 = sld [smem:[#allocation0]]
  $region30: #{gcn_forward.3} parent=0
    _
  %s6 = ssub.s32 1, %s4
  %s7 = scalar_select 0, %s6, %s4
  // Predicated region
  $region2: #{gcn_forward.3} parent=0 // pred_check
    _
  $region3: #{gcn_forward.3} parent=0 // pred_check_branch
    %9 = sbr.rel (0) target = $region5
  $region4: #{gcn_forward.3} parent=0 // pred_region
    _
  $region5: #{gcn_forward.3} parent=0 // pred_fallthru
    _
  // Predicated region
  $region6: #{gcn_forward.3} parent=0 // pred_check
    _
  $region7: #{gcn_forward.3} parent=0 // pred_check_branch
    %11 = sbr.rel (0) target = $region9
  $region8: #{gcn_forward.3} parent=0 // pred_region
    _
  $region9: #{gcn_forward.3} parent=0 // pred_fallthru
    _
  // Predicated region
  $region10: #{gcn_forward.3} parent=0 // pred_check
    _
  $region11: #{gcn_forward.3} parent=0 // pred_check_branch
    %13 = sbr.rel (0) target = $region13
  $region12: #{gcn_forward.3} parent=0 // pred_region
    _
  $region13: #{gcn_forward.3} parent=0 // pred_fallthru
    _
  %p14 = scmp.eq.s32.totalorder 0, 0
  // Predicated region
  $region14: #{gcn_forward.3} parent=0 // pred_check
    %p15 = pneg %p14
  $region15: #{gcn_forward.3} parent=0 // pred_check_branch
    %17 = sbr.rel (%p15) target = $region17
  $region16: #{gcn_forward.3} parent=0 // pred_region
    %18 = vst [vmem:[#allocation2] sm:$0xff] 0.0
    %19 = vst [vmem:[#allocation2 + $0x8] sm:$0xff] 0.0
    %20 = vst [vmem:[#allocation2 + $0x10] sm:$0xff] 0.0
    %21 = vst [vmem:[#allocation2 + $0x18] sm:$0xff] 0.0
    %22 = vst [vmem:[#allocation2 + $0x20] sm:$0xff] 0.0
    %23 = vst [vmem:[#allocation2 + $0x28] sm:$0xff] 0.0
    %24 = vst [vmem:[#allocation2 + $0x30] sm:$0xff] 0.0
    %25 = vst [vmem:[#allocation2 + $0x38] sm:$0xff] 0.0
    %26 = vst [vmem:[#allocation2 + $0x40] sm:$0xff] 0.0
    %27 = vst [vmem:[#allocation2 + $0x48] sm:$0xff] 0.0
    %28 = vst [vmem:[#allocation2 + $0x50] sm:$0xff] 0.0
    %29 = vst [vmem:[#allocation2 + $0x58] sm:$0xff] 0.0
    %30 = vst [vmem:[#allocation2 + $0x60] sm:$0xff] 0.0
    %31 = vst [vmem:[#allocation2 + $0x68] sm:$0xff] 0.0
    %32 = vst [vmem:[#allocation2 + $0x70] sm:$0xff] 0.0
    %33 = vst [vmem:[#allocation2 + $0x78] sm:$0xff] 0.0
  $region17: #{gcn_forward.3} parent=0 // pred_fallthru
    _
  %v34 = vld [vmem:[#allocation2] sm:$0xff]
  %v35 = vld [vmem:[#allocation2 + $0x8] sm:$0xff]
  %v36 = vld [vmem:[#allocation2 + $0x10] sm:$0xff]
  %v37 = vld [vmem:[#allocation2 + $0x18] sm:$0xff]
  %v38 = vld [vmem:[#allocation2 + $0x20] sm:$0xff]
  %v39 = vld [vmem:[#allocation2 + $0x28] sm:$0xff]
  %v40 = vld [vmem:[#allocation2 + $0x30] sm:$0xff]
  %v41 = vld [vmem:[#allocation2 + $0x38] sm:$0xff]
  %v42 = vld [vmem:[#allocation2 + $0x40] sm:$0xff]
  %v43 = vld [vmem:[#allocation2 + $0x48] sm:$0xff]
  %v44 = vld [vmem:[#allocation2 + $0x50] sm:$0xff]
  %v45 = vld [vmem:[#allocation2 + $0x58] sm:$0xff]
  %v46 = vld [vmem:[#allocation2 + $0x60] sm:$0xff]
  %v47 = vld [vmem:[#allocation2 + $0x68] sm:$0xff]
  %v48 = vld [vmem:[#allocation2 + $0x70] sm:$0xff]
  %v49 = vld [vmem:[#allocation2 + $0x78] sm:$0xff]
  %v50 = vld [vmem:[%s0] sm:$0xf]
  %v51 = vld [vmem:[%s0 + $0x4] sm:$0xf]
  %v52 = vld [vmem:[%s0 + $0x8] sm:$0xf]
  %v53 = vld [vmem:[%s0 + $0xc] sm:$0xf]
  %v54 = vld [vmem:[%s0 + $0x10] sm:$0xf]
  %v55 = vld [vmem:[%s0 + $0x14] sm:$0xf]
  %v56 = vld [vmem:[%s0 + $0x18] sm:$0xf]
  %v57 = vld [vmem:[%s0 + $0x1c] sm:$0xf]
  %v58 = vld [vmem:[%s0 + $0x20] sm:$0xf]
  %v59 = vld [vmem:[%s0 + $0x24] sm:$0xf]
  %v60 = vld [vmem:[%s0 + $0x28] sm:$0xf]
  %v61 = vld [vmem:[%s0 + $0x2c] sm:$0xf]
  %v62 = vld [vmem:[%s0 + $0x30] sm:$0xf]
  %v63 = vld [vmem:[%s0 + $0x34] sm:$0xf]
  %v64 = vld [vmem:[%s0 + $0x38] sm:$0xf]
  %v65 = vld [vmem:[%s0 + $0x3c] sm:$0xf]
  %v66 = vld [vmem:[%s1] sm:$0xf]
  %v67 = vld [vmem:[%s1 + $0x4] sm:$0xf]
  %v68 = vld [vmem:[%s1 + $0x8] sm:$0xf]
  %v69 = vld [vmem:[%s1 + $0xc] sm:$0xf]
  %v70 = vld [vmem:[%s1 + $0x10] sm:$0xf]
  %v71 = vld [vmem:[%s1 + $0x14] sm:$0xf]
  %v72 = vld [vmem:[%s1 + $0x18] sm:$0xf]
  %v73 = vld [vmem:[%s1 + $0x1c] sm:$0xf]
  %v74 = vld [vmem:[%s1 + $0x20] sm:$0xf]
  %v75 = vld [vmem:[%s1 + $0x24] sm:$0xf]
  %v76 = vld [vmem:[%s1 + $0x28] sm:$0xf]
  %v77 = vld [vmem:[%s1 + $0x2c] sm:$0xf]
  %v78 = vld [vmem:[%s1 + $0x30] sm:$0xf]
  %v79 = vld [vmem:[%s1 + $0x34] sm:$0xf]
  %v80 = vld [vmem:[%s1 + $0x38] sm:$0xf]
  %v81 = vld [vmem:[%s1 + $0x3c] sm:$0xf]
  %v98 = vunpack.c.l.b16 %v50
  %v99 = vunpack.c.l.b16 %v51
  %v100 = vunpack.c.l.b16 %v52
  %v101 = vunpack.c.l.b16 %v53
  %v102 = vunpack.c.l.b16 %v54
  %v103 = vunpack.c.l.b16 %v55
  %v104 = vunpack.c.l.b16 %v56
  %v105 = vunpack.c.l.b16 %v57
  %v106 = vunpack.c.l.b16 %v58
  %v107 = vunpack.c.l.b16 %v59
  %v108 = vunpack.c.l.b16 %v60
  %v109 = vunpack.c.l.b16 %v61
  %v110 = vunpack.c.l.b16 %v62
  %v111 = vunpack.c.l.b16 %v63
  %v112 = vunpack.c.l.b16 %v64
  %v113 = vunpack.c.l.b16 %v65
  %v114 = vpack.c.b16 %v99, %v98
  %v115 = vpack.c.b16 %v101, %v100
  %v116 = vpack.c.b16 %v103, %v102
  %v117 = vpack.c.b16 %v105, %v104
  %v118 = vpack.c.b16 %v107, %v106
  %v119 = vpack.c.b16 %v109, %v108
  %v120 = vpack.c.b16 %v111, %v110
  %v121 = vpack.c.b16 %v113, %v112
  %v146 = vunpack.c.l.b16 %v66
  %v147 = vunpack.c.l.b16 %v67
  %v148 = vunpack.c.l.b16 %v68
  %v149 = vunpack.c.l.b16 %v69
  %v150 = vunpack.c.l.b16 %v70
  %v151 = vunpack.c.l.b16 %v71
  %v152 = vunpack.c.l.b16 %v72
  %v153 = vunpack.c.l.b16 %v73
  %v154 = vunpack.c.l.b16 %v74
  %v155 = vunpack.c.l.b16 %v75
  %v156 = vunpack.c.l.b16 %v76
  %v157 = vunpack.c.l.b16 %v77
  %v158 = vunpack.c.l.b16 %v78
  %v159 = vunpack.c.l.b16 %v79
  %v160 = vunpack.c.l.b16 %v80
  %v161 = vunpack.c.l.b16 %v81
  %v162 = vpack.c.b16 %v147, %v146
  %v163 = vpack.c.b16 %v149, %v148
  %v164 = vpack.c.b16 %v151, %v150
  %v165 = vpack.c.b16 %v153, %v152
  %v166 = vpack.c.b16 %v155, %v154
  %v167 = vpack.c.b16 %v157, %v156
  %v168 = vpack.c.b16 %v159, %v158
  %v169 = vpack.c.b16 %v161, %v160
  %178 = vmatpush.bf16.msra.mxu0 %v169
  %179 = vmatpush.bf16.msra.mxu0 %v168
  %180 = vmatpush.bf16.msra.mxu0 %v167
  %181 = vmatpush.bf16.msra.mxu0 %v166
  %182 = vmatpush.bf16.msra.mxu0 %v165
  %183 = vmatpush.bf16.msra.mxu0 %v164
  %184 = vmatpush.bf16.msra.mxu0 %v163
  %185 = vmatpush.bf16.msra.mxu0 %v162
  %186 = vmatmul.bf16.gmra.mxu0 %v114
  %v187 = vpop.f32.mrf.mxu0
  %v188 = vadd.f32 0.0, %v187
  %v189 = vpop.f32.mrf.mxu0
  %v190 = vadd.f32 0.0, %v189
  %191 = vmatmul.bf16.gmra.mxu0 %v115
  %v192 = vpop.f32.mrf.mxu0
  %v193 = vadd.f32 0.0, %v192
  %v194 = vpop.f32.mrf.mxu0
  %v195 = vadd.f32 0.0, %v194
  %196 = vmatmul.bf16.gmra.mxu0 %v116
  %v197 = vpop.f32.mrf.mxu0
  %v198 = vadd.f32 0.0, %v197
  %v199 = vpop.f32.mrf.mxu0
  %v200 = vadd.f32 0.0, %v199
  %201 = vmatmul.bf16.gmra.mxu0 %v117
  %v202 = vpop.f32.mrf.mxu0
  %v203 = vadd.f32 0.0, %v202
  %v204 = vpop.f32.mrf.mxu0
  %v205 = vadd.f32 0.0, %v204
  %206 = vmatmul.bf16.gmra.mxu0 %v118
  %v207 = vpop.f32.mrf.mxu0
  %v208 = vadd.f32 0.0, %v207
  %v209 = vpop.f32.mrf.mxu0
  %v210 = vadd.f32 0.0, %v209
  %211 = vmatmul.bf16.gmra.mxu0 %v119
  %v212 = vpop.f32.mrf.mxu0
  %v213 = vadd.f32 0.0, %v212
  %v214 = vpop.f32.mrf.mxu0
  %v215 = vadd.f32 0.0, %v214
  %216 = vmatmul.bf16.gmra.mxu0 %v120
  %v217 = vpop.f32.mrf.mxu0
  %v218 = vadd.f32 0.0, %v217
  %v219 = vpop.f32.mrf.mxu0
  %v220 = vadd.f32 0.0, %v219
  %221 = vmatmul.bf16.gmra.mxu0 %v121
  %v222 = vpop.f32.mrf.mxu0
  %v223 = vadd.f32 0.0, %v222
  %v224 = vpop.f32.mrf.mxu0
  %v225 = vadd.f32 0.0, %v224
  %226 = vdwg.mxu0
  %v227 = vadd.f32 %v34, %v188
  %v228 = vadd.f32 %v35, %v190
  %v229 = vadd.f32 %v36, %v193
  %v230 = vadd.f32 %v37, %v195
  %v231 = vadd.f32 %v38, %v198
  %v232 = vadd.f32 %v39, %v200
  %v233 = vadd.f32 %v40, %v203
  %v234 = vadd.f32 %v41, %v205
  %v235 = vadd.f32 %v42, %v208
  %v236 = vadd.f32 %v43, %v210
  %v237 = vadd.f32 %v44, %v213
  %v238 = vadd.f32 %v45, %v215
  %v239 = vadd.f32 %v46, %v218
  %v240 = vadd.f32 %v47, %v220
  %v241 = vadd.f32 %v48, %v223
  %v242 = vadd.f32 %v49, %v225
  %243 = vst [vmem:[#allocation2] sm:$0xff] %v227
  %244 = vst [vmem:[#allocation2 + $0x8] sm:$0xff] %v228
  %245 = vst [vmem:[#allocation2 + $0x10] sm:$0xff] %v229
  %246 = vst [vmem:[#allocation2 + $0x18] sm:$0xff] %v230
  %247 = vst [vmem:[#allocation2 + $0x20] sm:$0xff] %v231
  %248 = vst [vmem:[#allocation2 + $0x28] sm:$0xff] %v232
  %249 = vst [vmem:[#allocation2 + $0x30] sm:$0xff] %v233
  %250 = vst [vmem:[#allocation2 + $0x38] sm:$0xff] %v234
  %251 = vst [vmem:[#allocation2 + $0x40] sm:$0xff] %v235
  %252 = vst [vmem:[#allocation2 + $0x48] sm:$0xff] %v236
  %253 = vst [vmem:[#allocation2 + $0x50] sm:$0xff] %v237
  %254 = vst [vmem:[#allocation2 + $0x58] sm:$0xff] %v238
  %255 = vst [vmem:[#allocation2 + $0x60] sm:$0xff] %v239
  %256 = vst [vmem:[#allocation2 + $0x68] sm:$0xff] %v240
  %257 = vst [vmem:[#allocation2 + $0x70] sm:$0xff] %v241
  %258 = vst [vmem:[#allocation2 + $0x78] sm:$0xff] %v242
  // Predicated region
  $region18: #{gcn_forward.3} parent=0 // pred_check
    %p259 = pneg %p14
  $region19: #{gcn_forward.3} parent=0 // pred_check_branch
    %261 = sbr.rel (%p259) target = $region21
  $region20: #{gcn_forward.3} parent=0 // pred_region
    %v262 = vld [vmem:[#allocation2] sm:$0xff]
    %v263 = vld [vmem:[#allocation2 + $0x8] sm:$0xff]
    %v264 = vld [vmem:[#allocation2 + $0x10] sm:$0xff]
    %v265 = vld [vmem:[#allocation2 + $0x18] sm:$0xff]
    %v266 = vld [vmem:[#allocation2 + $0x20] sm:$0xff]
    %v267 = vld [vmem:[#allocation2 + $0x28] sm:$0xff]
    %v268 = vld [vmem:[#allocation2 + $0x30] sm:$0xff]
    %v269 = vld [vmem:[#allocation2 + $0x38] sm:$0xff]
    %v270 = vld [vmem:[#allocation2 + $0x40] sm:$0xff]
    %v271 = vld [vmem:[#allocation2 + $0x48] sm:$0xff]
    %v272 = vld [vmem:[#allocation2 + $0x50] sm:$0xff]
    %v273 = vld [vmem:[#allocation2 + $0x58] sm:$0xff]
    %v274 = vld [vmem:[#allocation2 + $0x60] sm:$0xff]
    %v275 = vld [vmem:[#allocation2 + $0x68] sm:$0xff]
    %v276 = vld [vmem:[#allocation2 + $0x70] sm:$0xff]
    %v277 = vld [vmem:[#allocation2 + $0x78] sm:$0xff]
    %v278 = vld [vmem:[%s2] sm:$0x1]
    %v280 = vperm.slane %v278, 0
    %v282 = vadd.f32 %v262, %v280
    %v283 = vadd.f32 %v263, %v280
    %v284 = vadd.f32 %v264, %v280
    %v285 = vadd.f32 %v265, %v280
    %v286 = vadd.f32 %v266, %v280
    %v287 = vadd.f32 %v267, %v280
    %v288 = vadd.f32 %v268, %v280
    %v289 = vadd.f32 %v269, %v280
    %v290 = vadd.f32 %v270, %v280
    %v291 = vadd.f32 %v271, %v280
    %v292 = vadd.f32 %v272, %v280
    %v293 = vadd.f32 %v273, %v280
    %v294 = vadd.f32 %v274, %v280
    %v295 = vadd.f32 %v275, %v280
    %v296 = vadd.f32 %v276, %v280
    %v297 = vadd.f32 %v277, %v280
    %v298 = vlaneseq
    %v299 = vand.u32 %v298, 127
    %vm300 = vcmp.lt.s32.totalorder %v299, 8
    %v301 = vsel %vm300, %v282, -1e+30
    %v302 = vsel %vm300, %v283, -1e+30
    %v303 = vsel %vm300, %v284, -1e+30
    %v304 = vsel %vm300, %v285, -1e+30
    %v305 = vsel %vm300, %v286, -1e+30
    %v306 = vsel %vm300, %v287, -1e+30
    %v307 = vsel %vm300, %v288, -1e+30
    %v308 = vsel %vm300, %v289, -1e+30
    %v309 = vsel %vm300, %v290, -1e+30
    %v310 = vsel %vm300, %v291, -1e+30
    %v311 = vsel %vm300, %v292, -1e+30
    %v312 = vsel %vm300, %v293, -1e+30
    %v313 = vsel %vm300, %v294, -1e+30
    %v314 = vsel %vm300, %v295, -1e+30
    %v315 = vsel %vm300, %v296, -1e+30
    %v316 = vsel %vm300, %v297, -1e+30
    %317 = vmax.xlane.f32.xlu0 %v301
    %v318 = vpop.xlane.xlu0 %317
    %319 = vmax.xlane.f32.xlu0 %v302
    %v320 = vpop.xlane.xlu0 %319
    %321 = vmax.xlane.f32.xlu0 %v303
    %v322 = vpop.xlane.xlu0 %321
    %323 = vmax.xlane.f32.xlu0 %v304
    %v324 = vpop.xlane.xlu0 %323
    %325 = vmax.xlane.f32.xlu0 %v305
    %v326 = vpop.xlane.xlu0 %325
    %327 = vmax.xlane.f32.xlu0 %v306
    %v328 = vpop.xlane.xlu0 %327
    %329 = vmax.xlane.f32.xlu0 %v307
    %v330 = vpop.xlane.xlu0 %329
    %331 = vmax.xlane.f32.xlu0 %v308
    %v332 = vpop.xlane.xlu0 %331
    %333 = vmax.xlane.f32.xlu0 %v309
    %v334 = vpop.xlane.xlu0 %333
    %335 = vmax.xlane.f32.xlu0 %v310
    %v336 = vpop.xlane.xlu0 %335
    %337 = vmax.xlane.f32.xlu0 %v311
    %v338 = vpop.xlane.xlu0 %337
    %339 = vmax.xlane.f32.xlu0 %v312
    %v340 = vpop.xlane.xlu0 %339
    %341 = vmax.xlane.f32.xlu0 %v313
    %v342 = vpop.xlane.xlu0 %341
    %343 = vmax.xlane.f32.xlu0 %v314
    %v344 = vpop.xlane.xlu0 %343
    %345 = vmax.xlane.f32.xlu0 %v315
    %v346 = vpop.xlane.xlu0 %345
    %347 = vmax.xlane.f32.xlu0 %v316
    %v348 = vpop.xlane.xlu0 %347
    %v349 = vsub.f32 %v301, %v318
    %v350 = vsub.f32 %v302, %v320
    %v351 = vsub.f32 %v303, %v322
    %v352 = vsub.f32 %v304, %v324
    %v353 = vsub.f32 %v305, %v326
    %v354 = vsub.f32 %v306, %v328
    %v355 = vsub.f32 %v307, %v330
    %v356 = vsub.f32 %v308, %v332
    %v357 = vsub.f32 %v309, %v334
    %v358 = vsub.f32 %v310, %v336
    %v359 = vsub.f32 %v311, %v338
    %v360 = vsub.f32 %v312, %v340
    %v361 = vsub.f32 %v313, %v342
    %v362 = vsub.f32 %v314, %v344
    %v363 = vsub.f32 %v315, %v346
    %v364 = vsub.f32 %v316, %v348
    %v365 = vmul.f32 %v349, 1.442695
    %v366 = vpow.pop %v365
    %v367 = vmul.f32 %v350, 1.442695
    %v368 = vpow.pop %v367
    %v369 = vmul.f32 %v351, 1.442695
    %v370 = vpow.pop %v369
    %v371 = vmul.f32 %v352, 1.442695
    %v372 = vpow.pop %v371
    %v373 = vmul.f32 %v353, 1.442695
    %v374 = vpow.pop %v373
    %v375 = vmul.f32 %v354, 1.442695
    %v376 = vpow.pop %v375
    %v377 = vmul.f32 %v355, 1.442695
    %v378 = vpow.pop %v377
    %v379 = vmul.f32 %v356, 1.442695
    %v380 = vpow.pop %v379
    %v381 = vmul.f32 %v357, 1.442695
    %v382 = vpow.pop %v381
    %v383 = vmul.f32 %v358, 1.442695
    %v384 = vpow.pop %v383
    %v385 = vmul.f32 %v359, 1.442695
    %v386 = vpow.pop %v385
    %v387 = vmul.f32 %v360, 1.442695
    %v388 = vpow.pop %v387
    %v389 = vmul.f32 %v361, 1.442695
    %v390 = vpow.pop %v389
    %v391 = vmul.f32 %v362, 1.442695
    %v392 = vpow.pop %v391
    %v393 = vmul.f32 %v363, 1.442695
    %v394 = vpow.pop %v393
    %v395 = vmul.f32 %v364, 1.442695
    %v396 = vpow.pop %v395
    %v397 = vsel %vm300, %v366, 0.0
    %v398 = vsel %vm300, %v368, 0.0
    %v399 = vsel %vm300, %v370, 0.0
    %v400 = vsel %vm300, %v372, 0.0
    %v401 = vsel %vm300, %v374, 0.0
    %v402 = vsel %vm300, %v376, 0.0
    %v403 = vsel %vm300, %v378, 0.0
    %v404 = vsel %vm300, %v380, 0.0
    %v405 = vsel %vm300, %v382, 0.0
    %v406 = vsel %vm300, %v384, 0.0
    %v407 = vsel %vm300, %v386, 0.0
    %v408 = vsel %vm300, %v388, 0.0
    %v409 = vsel %vm300, %v390, 0.0
    %v410 = vsel %vm300, %v392, 0.0
    %v411 = vsel %vm300, %v394, 0.0
    %v412 = vsel %vm300, %v396, 0.0
    %413 = vadd.xlane.f32.xlu0 %v397
    %v414 = vpop.xlane.xlu0 %413
    %415 = vadd.xlane.f32.xlu0 %v398
    %v416 = vpop.xlane.xlu0 %415
    %417 = vadd.xlane.f32.xlu0 %v399
    %v418 = vpop.xlane.xlu0 %417
    %419 = vadd.xlane.f32.xlu0 %v400
    %v420 = vpop.xlane.xlu0 %419
    %421 = vadd.xlane.f32.xlu0 %v401
    %v422 = vpop.xlane.xlu0 %421
    %423 = vadd.xlane.f32.xlu0 %v402
    %v424 = vpop.xlane.xlu0 %423
    %425 = vadd.xlane.f32.xlu0 %v403
    %v426 = vpop.xlane.xlu0 %425
    %427 = vadd.xlane.f32.xlu0 %v404
    %v428 = vpop.xlane.xlu0 %427
    %429 = vadd.xlane.f32.xlu0 %v405
    %v430 = vpop.xlane.xlu0 %429
    %431 = vadd.xlane.f32.xlu0 %v406
    %v432 = vpop.xlane.xlu0 %431
    %433 = vadd.xlane.f32.xlu0 %v407
    %v434 = vpop.xlane.xlu0 %433
    %435 = vadd.xlane.f32.xlu0 %v408
    %v436 = vpop.xlane.xlu0 %435
    %437 = vadd.xlane.f32.xlu0 %v409
    %v438 = vpop.xlane.xlu0 %437
    %439 = vadd.xlane.f32.xlu0 %v410
    %v440 = vpop.xlane.xlu0 %439
    %441 = vadd.xlane.f32.xlu0 %v411
    %v442 = vpop.xlane.xlu0 %441
    %443 = vadd.xlane.f32.xlu0 %v412
    %v444 = vpop.xlane.xlu0 %443
    %v445 = vlog2.pop %v414
    %v446 = vmul.f32 %v445, 0.6931472
    %v447 = vlog2.pop %v416
    %v448 = vmul.f32 %v447, 0.6931472
    %v449 = vlog2.pop %v418
    %v450 = vmul.f32 %v449, 0.6931472
    %v451 = vlog2.pop %v420
    %v452 = vmul.f32 %v451, 0.6931472
    %v453 = vlog2.pop %v422
    %v454 = vmul.f32 %v453, 0.6931472
    %v455 = vlog2.pop %v424
    %v456 = vmul.f32 %v455, 0.6931472
    %v457 = vlog2.pop %v426
    %v458 = vmul.f32 %v457, 0.6931472
    %v459 = vlog2.pop %v428
    %v460 = vmul.f32 %v459, 0.6931472
    %v461 = vlog2.pop %v430
    %v462 = vmul.f32 %v461, 0.6931472
    %v463 = vlog2.pop %v432
    %v464 = vmul.f32 %v463, 0.6931472
    %v465 = vlog2.pop %v434
    %v466 = vmul.f32 %v465, 0.6931472
    %v467 = vlog2.pop %v436
    %v468 = vmul.f32 %v467, 0.6931472
    %v469 = vlog2.pop %v438
    %v470 = vmul.f32 %v469, 0.6931472
    %v471 = vlog2.pop %v440
    %v472 = vmul.f32 %v471, 0.6931472
    %v473 = vlog2.pop %v442
    %v474 = vmul.f32 %v473, 0.6931472
    %v475 = vlog2.pop %v444
    %v476 = vmul.f32 %v475, 0.6931472
    %v477 = vsub.f32 %v349, %v446
    %v478 = vsub.f32 %v350, %v448
    %v479 = vsub.f32 %v351, %v450
    %v480 = vsub.f32 %v352, %v452
    %v481 = vsub.f32 %v353, %v454
    %v482 = vsub.f32 %v354, %v456
    %v483 = vsub.f32 %v355, %v458
    %v484 = vsub.f32 %v356, %v460
    %v485 = vsub.f32 %v357, %v462
    %v486 = vsub.f32 %v358, %v464
    %v487 = vsub.f32 %v359, %v466
    %v488 = vsub.f32 %v360, %v468
    %v489 = vsub.f32 %v361, %v470
    %v490 = vsub.f32 %v362, %v472
    %v491 = vsub.f32 %v363, %v474
    %v492 = vsub.f32 %v364, %v476
    %493 = vst [vmem:[%s3] sm:$0xff] %v477
    %494 = vst [vmem:[%s3 + $0x8] sm:$0xff] %v478
    %495 = vst [vmem:[%s3 + $0x10] sm:$0xff] %v479
    %496 = vst [vmem:[%s3 + $0x18] sm:$0xff] %v480
    %497 = vst [vmem:[%s3 + $0x20] sm:$0xff] %v481
    %498 = vst [vmem:[%s3 + $0x28] sm:$0xff] %v482
    %499 = vst [vmem:[%s3 + $0x30] sm:$0xff] %v483
    %500 = vst [vmem:[%s3 + $0x38] sm:$0xff] %v484
    %501 = vst [vmem:[%s3 + $0x40] sm:$0xff] %v485
    %502 = vst [vmem:[%s3 + $0x48] sm:$0xff] %v486
    %503 = vst [vmem:[%s3 + $0x50] sm:$0xff] %v487
    %504 = vst [vmem:[%s3 + $0x58] sm:$0xff] %v488
    %505 = vst [vmem:[%s3 + $0x60] sm:$0xff] %v489
    %506 = vst [vmem:[%s3 + $0x68] sm:$0xff] %v490
    %507 = vst [vmem:[%s3 + $0x70] sm:$0xff] %v491
    %508 = vst [vmem:[%s3 + $0x78] sm:$0xff] %v492
  $region21: #{gcn_forward.3} parent=0 // pred_fallthru
    _
  // Predicated region
  $region22: #{gcn_forward.3} parent=0 // pred_check
    _
  $region23: #{gcn_forward.3} parent=0 // pred_check_branch
    %510 = sbr.rel (0) target = $region25
  $region24: #{gcn_forward.3} parent=0 // pred_region
    _
  $region25: #{gcn_forward.3} parent=0 // pred_fallthru
    _
  // Predicated region
  $region26: #{gcn_forward.3} parent=0 // pred_check
    _
  $region27: #{gcn_forward.3} parent=0 // pred_check_branch
    %512 = sbr.rel (0) target = $region29
  $region28: #{gcn_forward.3} parent=0 // pred_region
    _
  $region29: #{gcn_forward.3} parent=0 // pred_fallthru
    _

// kernel: gcn_forward.2
$region0: #{gcn_forward.2}
  #allocation0 [shape = 'u32[]', space=smem, size = 0x4, offset = 0x4, fixed_abs, tag = 'smem constant byte address 0x4 - core index']
  #allocation1 [shape = 'u32[72,128]{1,0:T(1,128)}', space=vmem, size = 0x9000, scoped, tag = 'internal scratch']
  #allocation2 [shape = 'f32[128,128]{1,0:T(8,128)}', space=vmem, size = 0x10000, scoped, tag = 'scratch operand']
  %s0 = inlined_call_operand.vmem [shape: bf16[128,128], index: 0, kind: input, shape index: {}]
  %s1 = inlined_call_operand.vmem [shape: bf16[128,128], index: 1, kind: input, shape index: {}]
  %s2 = inlined_call_operand.vmem [shape: bf16[128,128], index: 2, kind: input, shape index: {}]
  %s3 = inlined_call_operand.vmem [shape: f32[1,128], index: 3, kind: input, shape index: {}]
  %s4 = inlined_call_operand.vmem [shape: bf16[128,128], index: 4, kind: input, shape index: {}]
  %s5 = inlined_call_operand.vmem [shape: bf16[128,128], index: 5, kind: output, shape index: {}]
  %s6 = sld [smem:[#allocation0]]
  $region38: #{gcn_forward.2} parent=0
    _
  %s8 = ssub.s32 1, %s6
  %s9 = scalar_select 0, %s8, %s6
  // Predicated region
  $region2: #{gcn_forward.2} parent=0 // pred_check
    _
  $region3: #{gcn_forward.2} parent=0 // pred_check_branch
    %11 = sbr.rel (0) target = $region5
  $region4: #{gcn_forward.2} parent=0 // pred_region
    _
  $region5: #{gcn_forward.2} parent=0 // pred_fallthru
    _
  // Predicated region
  $region6: #{gcn_forward.2} parent=0 // pred_check
    _
  $region7: #{gcn_forward.2} parent=0 // pred_check_branch
    %13 = sbr.rel (0) target = $region9
  $region8: #{gcn_forward.2} parent=0 // pred_region
    _
  $region9: #{gcn_forward.2} parent=0 // pred_fallthru
    _
  // Predicated region
  $region10: #{gcn_forward.2} parent=0 // pred_check
    _
  $region11: #{gcn_forward.2} parent=0 // pred_check_branch
    %15 = sbr.rel (0) target = $region13
  $region12: #{gcn_forward.2} parent=0 // pred_region
    _
  $region13: #{gcn_forward.2} parent=0 // pred_fallthru
    _
  // Predicated region
  $region14: #{gcn_forward.2} parent=0 // pred_check
    _
  $region15: #{gcn_forward.2} parent=0 // pred_check_branch
    %17 = sbr.rel (0) target = $region17
  $region16: #{gcn_forward.2} parent=0 // pred_region
    _
  $region17: #{gcn_forward.2} parent=0 // pred_fallthru
    _
  // Predicated region
  $region18: #{gcn_forward.2} parent=0 // pred_check
    _
  $region19: #{gcn_forward.2} parent=0 // pred_check_branch
    %19 = sbr.rel (0) target = $region21
  $region20: #{gcn_forward.2} parent=0 // pred_region
    _
  $region21: #{gcn_forward.2} parent=0 // pred_fallthru
    _
  %p20 = scmp.eq.s32.totalorder 0, 0
  // Predicated region
  $region22: #{gcn_forward.2} parent=0 // pred_check
    %p21 = pneg %p20
  $region23: #{gcn_forward.2} parent=0 // pred_check_branch
    %23 = sbr.rel (%p21) target = $region25
  $region24: #{gcn_forward.2} parent=0 // pred_region
    %24 = vst [vmem:[#allocation2] sm:$0xff] 0.0
    %25 = vst [vmem:[#allocation2 + $0x8] sm:$0xff] 0.0
    %26 = vst [vmem:[#allocation2 + $0x10] sm:$0xff] 0.0
    %27 = vst [vmem:[#allocation2 + $0x18] sm:$0xff] 0.0
    %28 = vst [vmem:[#allocation2 + $0x20] sm:$0xff] 0.0
    %29 = vst [vmem:[#allocation2 + $0x28] sm:$0xff] 0.0
    %30 = vst [vmem:[#allocation2 + $0x30] sm:$0xff] 0.0
    %31 = vst [vmem:[#allocation2 + $0x38] sm:$0xff] 0.0
    %32 = vst [vmem:[#allocation2 + $0x40] sm:$0xff] 0.0
    %33 = vst [vmem:[#allocation2 + $0x48] sm:$0xff] 0.0
    %34 = vst [vmem:[#allocation2 + $0x50] sm:$0xff] 0.0
    %35 = vst [vmem:[#allocation2 + $0x58] sm:$0xff] 0.0
    %36 = vst [vmem:[#allocation2 + $0x60] sm:$0xff] 0.0
    %37 = vst [vmem:[#allocation2 + $0x68] sm:$0xff] 0.0
    %38 = vst [vmem:[#allocation2 + $0x70] sm:$0xff] 0.0
    %39 = vst [vmem:[#allocation2 + $0x78] sm:$0xff] 0.0
  $region25: #{gcn_forward.2} parent=0 // pred_fallthru
    _
  %v40 = vld [vmem:[#allocation2] sm:$0xff]
  %v41 = vld [vmem:[#allocation2 + $0x8] sm:$0xff]
  %v42 = vld [vmem:[#allocation2 + $0x10] sm:$0xff]
  %v43 = vld [vmem:[#allocation2 + $0x18] sm:$0xff]
  %v44 = vld [vmem:[#allocation2 + $0x20] sm:$0xff]
  %v45 = vld [vmem:[#allocation2 + $0x28] sm:$0xff]
  %v46 = vld [vmem:[#allocation2 + $0x30] sm:$0xff]
  %v47 = vld [vmem:[#allocation2 + $0x38] sm:$0xff]
  %v48 = vld [vmem:[#allocation2 + $0x40] sm:$0xff]
  %v49 = vld [vmem:[#allocation2 + $0x48] sm:$0xff]
  %v50 = vld [vmem:[#allocation2 + $0x50] sm:$0xff]
  %v51 = vld [vmem:[#allocation2 + $0x58] sm:$0xff]
  %v52 = vld [vmem:[#allocation2 + $0x60] sm:$0xff]
  %v53 = vld [vmem:[#allocation2 + $0x68] sm:$0xff]
  %v54 = vld [vmem:[#allocation2 + $0x70] sm:$0xff]
  %v55 = vld [vmem:[#allocation2 + $0x78] sm:$0xff]
  %v56 = vld [vmem:[%s0] sm:$0xf]
  %v57 = vld [vmem:[%s0 + $0x4] sm:$0xf]
  %v58 = vld [vmem:[%s0 + $0x8] sm:$0xf]
  %v59 = vld [vmem:[%s0 + $0xc] sm:$0xf]
  %v60 = vld [vmem:[%s0 + $0x10] sm:$0xf]
  %v61 = vld [vmem:[%s0 + $0x14] sm:$0xf]
  %v62 = vld [vmem:[%s0 + $0x18] sm:$0xf]
  %v63 = vld [vmem:[%s0 + $0x1c] sm:$0xf]
  %v64 = vld [vmem:[%s0 + $0x20] sm:$0xf]
  %v65 = vld [vmem:[%s0 + $0x24] sm:$0xf]
  %v66 = vld [vmem:[%s0 + $0x28] sm:$0xf]
  %v67 = vld [vmem:[%s0 + $0x2c] sm:$0xf]
  %v68 = vld [vmem:[%s0 + $0x30] sm:$0xf]
  %v69 = vld [vmem:[%s0 + $0x34] sm:$0xf]
  %v70 = vld [vmem:[%s0 + $0x38] sm:$0xf]
  %v71 = vld [vmem:[%s0 + $0x3c] sm:$0xf]
  %v72 = vld [vmem:[%s1] sm:$0xf]
  %v73 = vld [vmem:[%s1 + $0x4] sm:$0xf]
  %v74 = vld [vmem:[%s1 + $0x8] sm:$0xf]
  %v75 = vld [vmem:[%s1 + $0xc] sm:$0xf]
  %v76 = vld [vmem:[%s1 + $0x10] sm:$0xf]
  %v77 = vld [vmem:[%s1 + $0x14] sm:$0xf]
  %v78 = vld [vmem:[%s1 + $0x18] sm:$0xf]
  %v79 = vld [vmem:[%s1 + $0x1c] sm:$0xf]
  %v80 = vld [vmem:[%s1 + $0x20] sm:$0xf]
  %v81 = vld [vmem:[%s1 + $0x24] sm:$0xf]
  %v82 = vld [vmem:[%s1 + $0x28] sm:$0xf]
  %v83 = vld [vmem:[%s1 + $0x2c] sm:$0xf]
  %v84 = vld [vmem:[%s1 + $0x30] sm:$0xf]
  %v85 = vld [vmem:[%s1 + $0x34] sm:$0xf]
  %v86 = vld [vmem:[%s1 + $0x38] sm:$0xf]
  %v87 = vld [vmem:[%s1 + $0x3c] sm:$0xf]
  %v104 = vunpack.c.l.b16 %v56
  %v105 = vunpack.c.l.b16 %v57
  %v106 = vunpack.c.l.b16 %v58
  %v107 = vunpack.c.l.b16 %v59
  %v108 = vunpack.c.l.b16 %v60
  %v109 = vunpack.c.l.b16 %v61
  %v110 = vunpack.c.l.b16 %v62
  %v111 = vunpack.c.l.b16 %v63
  %v112 = vunpack.c.l.b16 %v64
  %v113 = vunpack.c.l.b16 %v65
  %v114 = vunpack.c.l.b16 %v66
  %v115 = vunpack.c.l.b16 %v67
  %v116 = vunpack.c.l.b16 %v68
  %v117 = vunpack.c.l.b16 %v69
  %v118 = vunpack.c.l.b16 %v70
  %v119 = vunpack.c.l.b16 %v71
  %v120 = vpack.c.b16 %v105, %v104
  %v121 = vpack.c.b16 %v107, %v106
  %v122 = vpack.c.b16 %v109, %v108
  %v123 = vpack.c.b16 %v111, %v110
  %v124 = vpack.c.b16 %v113, %v112
  %v125 = vpack.c.b16 %v115, %v114
  %v126 = vpack.c.b16 %v117, %v116
  %v127 = vpack.c.b16 %v119, %v118
  %v152 = vunpack.c.l.b16 %v72
  %v153 = vunpack.c.l.b16 %v73
  %v154 = vunpack.c.l.b16 %v74
  %v155 = vunpack.c.l.b16 %v75
  %v156 = vunpack.c.l.b16 %v76
  %v157 = vunpack.c.l.b16 %v77
  %v158 = vunpack.c.l.b16 %v78
  %v159 = vunpack.c.l.b16 %v79
  %v160 = vunpack.c.l.b16 %v80
  %v161 = vunpack.c.l.b16 %v81
  %v162 = vunpack.c.l.b16 %v82
  %v163 = vunpack.c.l.b16 %v83
  %v164 = vunpack.c.l.b16 %v84
  %v165 = vunpack.c.l.b16 %v85
  %v166 = vunpack.c.l.b16 %v86
  %v167 = vunpack.c.l.b16 %v87
  %v168 = vpack.c.b16 %v153, %v152
  %v169 = vpack.c.b16 %v155, %v154
  %v170 = vpack.c.b16 %v157, %v156
  %v171 = vpack.c.b16 %v159, %v158
  %v172 = vpack.c.b16 %v161, %v160
  %v173 = vpack.c.b16 %v163, %v162
  %v174 = vpack.c.b16 %v165, %v164
  %v175 = vpack.c.b16 %v167, %v166
  %184 = vmatpush.bf16.msra.mxu0 %v175
  %185 = vmatpush.bf16.msra.mxu0 %v174
  %186 = vmatpush.bf16.msra.mxu0 %v173
  %187 = vmatpush.bf16.msra.mxu0 %v172
  %188 = vmatpush.bf16.msra.mxu0 %v171
  %189 = vmatpush.bf16.msra.mxu0 %v170
  %190 = vmatpush.bf16.msra.mxu0 %v169
  %191 = vmatpush.bf16.msra.mxu0 %v168
  %192 = vmatmul.bf16.gmra.mxu0 %v120
  %v193 = vpop.f32.mrf.mxu0
  %v194 = vadd.f32 0.0, %v193
  %v195 = vpop.f32.mrf.mxu0
  %v196 = vadd.f32 0.0, %v195
  %197 = vmatmul.bf16.gmra.mxu0 %v121
  %v198 = vpop.f32.mrf.mxu0
  %v199 = vadd.f32 0.0, %v198
  %v200 = vpop.f32.mrf.mxu0
  %v201 = vadd.f32 0.0, %v200
  %202 = vmatmul.bf16.gmra.mxu0 %v122
  %v203 = vpop.f32.mrf.mxu0
  %v204 = vadd.f32 0.0, %v203
  %v205 = vpop.f32.mrf.mxu0
  %v206 = vadd.f32 0.0, %v205
  %207 = vmatmul.bf16.gmra.mxu0 %v123
  %v208 = vpop.f32.mrf.mxu0
  %v209 = vadd.f32 0.0, %v208
  %v210 = vpop.f32.mrf.mxu0
  %v211 = vadd.f32 0.0, %v210
  %212 = vmatmul.bf16.gmra.mxu0 %v124
  %v213 = vpop.f32.mrf.mxu0
  %v214 = vadd.f32 0.0, %v213
  %v215 = vpop.f32.mrf.mxu0
  %v216 = vadd.f32 0.0, %v215
  %217 = vmatmul.bf16.gmra.mxu0 %v125
  %v218 = vpop.f32.mrf.mxu0
  %v219 = vadd.f32 0.0, %v218
  %v220 = vpop.f32.mrf.mxu0
  %v221 = vadd.f32 0.0, %v220
  %222 = vmatmul.bf16.gmra.mxu0 %v126
  %v223 = vpop.f32.mrf.mxu0
  %v224 = vadd.f32 0.0, %v223
  %v225 = vpop.f32.mrf.mxu0
  %v226 = vadd.f32 0.0, %v225
  %227 = vmatmul.bf16.gmra.mxu0 %v127
  %v228 = vpop.f32.mrf.mxu0
  %v229 = vadd.f32 0.0, %v228
  %v230 = vpop.f32.mrf.mxu0
  %v231 = vadd.f32 0.0, %v230
  %232 = vdwg.mxu0
  %v233 = vadd.f32 %v40, %v194
  %v234 = vadd.f32 %v41, %v196
  %v235 = vadd.f32 %v42, %v199
  %v236 = vadd.f32 %v43, %v201
  %v237 = vadd.f32 %v44, %v204
  %v238 = vadd.f32 %v45, %v206
  %v239 = vadd.f32 %v46, %v209
  %v240 = vadd.f32 %v47, %v211
  %v241 = vadd.f32 %v48, %v214
  %v242 = vadd.f32 %v49, %v216
  %v243 = vadd.f32 %v50, %v219
  %v244 = vadd.f32 %v51, %v221
  %v245 = vadd.f32 %v52, %v224
  %v246 = vadd.f32 %v53, %v226
  %v247 = vadd.f32 %v54, %v229
  %v248 = vadd.f32 %v55, %v231
  %249 = vst [vmem:[#allocation2] sm:$0xff] %v233
  %250 = vst [vmem:[#allocation2 + $0x8] sm:$0xff] %v234
  %251 = vst [vmem:[#allocation2 + $0x10] sm:$0xff] %v235
  %252 = vst [vmem:[#allocation2 + $0x18] sm:$0xff] %v236
  %253 = vst [vmem:[#allocation2 + $0x20] sm:$0xff] %v237
  %254 = vst [vmem:[#allocation2 + $0x28] sm:$0xff] %v238
  %255 = vst [vmem:[#allocation2 + $0x30] sm:$0xff] %v239
  %256 = vst [vmem:[#allocation2 + $0x38] sm:$0xff] %v240
  %257 = vst [vmem:[#allocation2 + $0x40] sm:$0xff] %v241
  %258 = vst [vmem:[#allocation2 + $0x48] sm:$0xff] %v242
  %259 = vst [vmem:[#allocation2 + $0x50] sm:$0xff] %v243
  %260 = vst [vmem:[#allocation2 + $0x58] sm:$0xff] %v244
  %261 = vst [vmem:[#allocation2 + $0x60] sm:$0xff] %v245
  %262 = vst [vmem:[#allocation2 + $0x68] sm:$0xff] %v246
  %263 = vst [vmem:[#allocation2 + $0x70] sm:$0xff] %v247
  %264 = vst [vmem:[#allocation2 + $0x78] sm:$0xff] %v248
  // Predicated region
  $region26: #{gcn_forward.2} parent=0 // pred_check
    %p265 = pneg %p20
  $region27: #{gcn_forward.2} parent=0 // pred_check_branch
    %267 = sbr.rel (%p265) target = $region29
  $region28: #{gcn_forward.2} parent=0 // pred_region
    %v268 = vld [vmem:[#allocation2] sm:$0xff]
    %v269 = vld [vmem:[#allocation2 + $0x8] sm:$0xff]
    %v270 = vld [vmem:[#allocation2 + $0x10] sm:$0xff]
    %v271 = vld [vmem:[#allocation2 + $0x18] sm:$0xff]
    %v272 = vld [vmem:[#allocation2 + $0x20] sm:$0xff]
    %v273 = vld [vmem:[#allocation2 + $0x28] sm:$0xff]
    %v274 = vld [vmem:[#allocation2 + $0x30] sm:$0xff]
    %v275 = vld [vmem:[#allocation2 + $0x38] sm:$0xff]
    %v276 = vld [vmem:[#allocation2 + $0x40] sm:$0xff]
    %v277 = vld [vmem:[#allocation2 + $0x48] sm:$0xff]
    %v278 = vld [vmem:[#allocation2 + $0x50] sm:$0xff]
    %v279 = vld [vmem:[#allocation2 + $0x58] sm:$0xff]
    %v280 = vld [vmem:[#allocation2 + $0x60] sm:$0xff]
    %v281 = vld [vmem:[#allocation2 + $0x68] sm:$0xff]
    %v282 = vld [vmem:[#allocation2 + $0x70] sm:$0xff]
    %v283 = vld [vmem:[#allocation2 + $0x78] sm:$0xff]
    %v284 = vpack.c.bf16 %v269, %v268
    %v285 = vpack.c.bf16 %v271, %v270
    %v286 = vpack.c.bf16 %v273, %v272
    %v287 = vpack.c.bf16 %v275, %v274
    %v288 = vpack.c.bf16 %v277, %v276
    %v289 = vpack.c.bf16 %v279, %v278
    %v290 = vpack.c.bf16 %v281, %v280
    %v291 = vpack.c.bf16 %v283, %v282
    %v292 = vld [vmem:[%s2] sm:$0xf]
    %v293 = vld [vmem:[%s2 + $0x4] sm:$0xf]
    %v294 = vld [vmem:[%s2 + $0x8] sm:$0xf]
    %v295 = vld [vmem:[%s2 + $0xc] sm:$0xf]
    %v296 = vld [vmem:[%s2 + $0x10] sm:$0xf]
    %v297 = vld [vmem:[%s2 + $0x14] sm:$0xf]
    %v298 = vld [vmem:[%s2 + $0x18] sm:$0xf]
    %v299 = vld [vmem:[%s2 + $0x1c] sm:$0xf]
    %v300 = vld [vmem:[%s2 + $0x20] sm:$0xf]
    %v301 = vld [vmem:[%s2 + $0x24] sm:$0xf]
    %v302 = vld [vmem:[%s2 + $0x28] sm:$0xf]
    %v303 = vld [vmem:[%s2 + $0x2c] sm:$0xf]
    %v304 = vld [vmem:[%s2 + $0x30] sm:$0xf]
    %v305 = vld [vmem:[%s2 + $0x34] sm:$0xf]
    %v306 = vld [vmem:[%s2 + $0x38] sm:$0xf]
    %v307 = vld [vmem:[%s2 + $0x3c] sm:$0xf]
    %v308 = vld [vmem:[%s3] sm:$0x1]
    %v310 = vperm.slane %v308, 0
    %v328 = vunpack.c.l.b16 %v292
    %v329 = vunpack.c.l.b16 %v293
    %v330 = vunpack.c.l.b16 %v294
    %v331 = vunpack.c.l.b16 %v295
    %v332 = vunpack.c.l.b16 %v296
    %v333 = vunpack.c.l.b16 %v297
    %v334 = vunpack.c.l.b16 %v298
    %v335 = vunpack.c.l.b16 %v299
    %v336 = vunpack.c.l.b16 %v300
    %v337 = vunpack.c.l.b16 %v301
    %v338 = vunpack.c.l.b16 %v302
    %v339 = vunpack.c.l.b16 %v303
    %v340 = vunpack.c.l.b16 %v304
    %v341 = vunpack.c.l.b16 %v305
    %v342 = vunpack.c.l.b16 %v306
    %v343 = vunpack.c.l.b16 %v307
    %v344 = vpack.c.b16 %v329, %v328
    %v345 = vpack.c.b16 %v331, %v330
    %v346 = vpack.c.b16 %v333, %v332
    %v347 = vpack.c.b16 %v335, %v334
    %v348 = vpack.c.b16 %v337, %v336
    %v349 = vpack.c.b16 %v339, %v338
    %v350 = vpack.c.b16 %v341, %v340
    %v351 = vpack.c.b16 %v343, %v342
    %360 = vmatpush.bf16.msra.mxu0 %v351
    %361 = vmatpush.bf16.msra.mxu0 %v350
    %362 = vmatpush.bf16.msra.mxu0 %v349
    %363 = vmatpush.bf16.msra.mxu0 %v348
    %364 = vmatpush.bf16.msra.mxu0 %v347
    %365 = vmatpush.bf16.msra.mxu0 %v346
    %366 = vmatpush.bf16.msra.mxu0 %v345
    %367 = vmatpush.bf16.msra.mxu0 %v344
    %368 = vmatmul.bf16.gmra.mxu0 %v284
    %v369 = vpop.f32.mrf.mxu0
    %v370 = vadd.f32 %v310, %v369
    %v371 = vpop.f32.mrf.mxu0
    %v372 = vadd.f32 %v310, %v371
    %373 = vmatmul.bf16.gmra.mxu0 %v285
    %v374 = vpop.f32.mrf.mxu0
    %v375 = vadd.f32 %v310, %v374
    %v376 = vpop.f32.mrf.mxu0
    %v377 = vadd.f32 %v310, %v376
    %378 = vmatmul.bf16.gmra.mxu0 %v286
    %v379 = vpop.f32.mrf.mxu0
    %v380 = vadd.f32 %v310, %v379
    %v381 = vpop.f32.mrf.mxu0
    %v382 = vadd.f32 %v310, %v381
    %383 = vmatmul.bf16.gmra.mxu0 %v287
    %v384 = vpop.f32.mrf.mxu0
    %v385 = vadd.f32 %v310, %v384
    %v386 = vpop.f32.mrf.mxu0
    %v387 = vadd.f32 %v310, %v386
    %388 = vmatmul.bf16.gmra.mxu0 %v288
    %v389 = vpop.f32.mrf.mxu0
    %v390 = vadd.f32 %v310, %v389
    %v391 = vpop.f32.mrf.mxu0
    %v392 = vadd.f32 %v310, %v391
    %393 = vmatmul.bf16.gmra.mxu0 %v289
    %v394 = vpop.f32.mrf.mxu0
    %v395 = vadd.f32 %v310, %v394
    %v396 = vpop.f32.mrf.mxu0
    %v397 = vadd.f32 %v310, %v396
    %398 = vmatmul.bf16.gmra.mxu0 %v290
    %v399 = vpop.f32.mrf.mxu0
    %v400 = vadd.f32 %v310, %v399
    %v401 = vpop.f32.mrf.mxu0
    %v402 = vadd.f32 %v310, %v401
    %403 = vmatmul.bf16.gmra.mxu0 %v291
    %v404 = vpop.f32.mrf.mxu0
    %v405 = vadd.f32 %v310, %v404
    %v406 = vpop.f32.mrf.mxu0
    %v407 = vadd.f32 %v310, %v406
    %408 = vdwg.mxu0
    %v409 = vmax.f32 %v370, 0.0
    %v410 = vmax.f32 %v372, 0.0
    %v411 = vmax.f32 %v375, 0.0
    %v412 = vmax.f32 %v377, 0.0
    %v413 = vmax.f32 %v380, 0.0
    %v414 = vmax.f32 %v382, 0.0
    %v415 = vmax.f32 %v385, 0.0
    %v416 = vmax.f32 %v387, 0.0
    %v417 = vmax.f32 %v390, 0.0
    %v418 = vmax.f32 %v392, 0.0
    %v419 = vmax.f32 %v395, 0.0
    %v420 = vmax.f32 %v397, 0.0
    %v421 = vmax.f32 %v400, 0.0
    %v422 = vmax.f32 %v402, 0.0
    %v423 = vmax.f32 %v405, 0.0
    %v424 = vmax.f32 %v407, 0.0
    %v425 = vpack.c.bf16 %v410, %v409
    %v426 = vpack.c.bf16 %v412, %v411
    %v427 = vpack.c.bf16 %v414, %v413
    %v428 = vpack.c.bf16 %v416, %v415
    %v429 = vpack.c.bf16 %v418, %v417
    %v430 = vpack.c.bf16 %v420, %v419
    %v431 = vpack.c.bf16 %v422, %v421
    %v432 = vpack.c.bf16 %v424, %v423
    %v433 = vld [vmem:[%s4] sm:$0xf]
    %v434 = vld [vmem:[%s4 + $0x4] sm:$0xf]
    %v435 = vld [vmem:[%s4 + $0x8] sm:$0xf]
    %v436 = vld [vmem:[%s4 + $0xc] sm:$0xf]
    %v437 = vld [vmem:[%s4 + $0x10] sm:$0xf]
    %v438 = vld [vmem:[%s4 + $0x14] sm:$0xf]
    %v439 = vld [vmem:[%s4 + $0x18] sm:$0xf]
    %v440 = vld [vmem:[%s4 + $0x1c] sm:$0xf]
    %v441 = vld [vmem:[%s4 + $0x20] sm:$0xf]
    %v442 = vld [vmem:[%s4 + $0x24] sm:$0xf]
    %v443 = vld [vmem:[%s4 + $0x28] sm:$0xf]
    %v444 = vld [vmem:[%s4 + $0x2c] sm:$0xf]
    %v445 = vld [vmem:[%s4 + $0x30] sm:$0xf]
    %v446 = vld [vmem:[%s4 + $0x34] sm:$0xf]
    %v447 = vld [vmem:[%s4 + $0x38] sm:$0xf]
    %v448 = vld [vmem:[%s4 + $0x3c] sm:$0xf]
    %v465 = vunpack.c.l.b16 %v433
    %v466 = vunpack.c.l.b16 %v434
    %v467 = vunpack.c.l.b16 %v435
    %v468 = vunpack.c.l.b16 %v436
    %v469 = vunpack.c.l.b16 %v437
    %v470 = vunpack.c.l.b16 %v438
    %v471 = vunpack.c.l.b16 %v439
    %v472 = vunpack.c.l.b16 %v440
    %v473 = vunpack.c.l.b16 %v441
    %v474 = vunpack.c.l.b16 %v442
    %v475 = vunpack.c.l.b16 %v443
    %v476 = vunpack.c.l.b16 %v444
    %v477 = vunpack.c.l.b16 %v445
    %v478 = vunpack.c.l.b16 %v446
    %v479 = vunpack.c.l.b16 %v447
    %v480 = vunpack.c.l.b16 %v448
    %v481 = vpack.c.b16 %v466, %v465
    %v482 = vpack.c.b16 %v468, %v467
    %v483 = vpack.c.b16 %v470, %v469
    %v484 = vpack.c.b16 %v472, %v471
    %v485 = vpack.c.b16 %v474, %v473
    %v486 = vpack.c.b16 %v476, %v475
    %v487 = vpack.c.b16 %v478, %v477
    %v488 = vpack.c.b16 %v480, %v479
    %497 = vmatpush.bf16.msra.mxu0 %v488
    %498 = vmatpush.bf16.msra.mxu0 %v487
    %499 = vmatpush.bf16.msra.mxu0 %v486
    %500 = vmatpush.bf16.msra.mxu0 %v485
    %501 = vmatpush.bf16.msra.mxu0 %v484
    %502 = vmatpush.bf16.msra.mxu0 %v483
    %503 = vmatpush.bf16.msra.mxu0 %v482
    %504 = vmatpush.bf16.msra.mxu0 %v481
    %505 = vmatmul.bf16.gmra.mxu0 %v425
    %v506 = vpop.f32.mrf.mxu0
    %v507 = vadd.f32 0.0, %v506
    %v508 = vpop.f32.mrf.mxu0
    %v509 = vadd.f32 0.0, %v508
    %510 = vmatmul.bf16.gmra.mxu0 %v426
    %v511 = vpop.f32.mrf.mxu0
    %v512 = vadd.f32 0.0, %v511
    %v513 = vpop.f32.mrf.mxu0
    %v514 = vadd.f32 0.0, %v513
    %515 = vmatmul.bf16.gmra.mxu0 %v427
    %v516 = vpop.f32.mrf.mxu0
    %v517 = vadd.f32 0.0, %v516
    %v518 = vpop.f32.mrf.mxu0
    %v519 = vadd.f32 0.0, %v518
    %520 = vmatmul.bf16.gmra.mxu0 %v428
    %v521 = vpop.f32.mrf.mxu0
    %v522 = vadd.f32 0.0, %v521
    %v523 = vpop.f32.mrf.mxu0
    %v524 = vadd.f32 0.0, %v523
    %525 = vmatmul.bf16.gmra.mxu0 %v429
    %v526 = vpop.f32.mrf.mxu0
    %v527 = vadd.f32 0.0, %v526
    %v528 = vpop.f32.mrf.mxu0
    %v529 = vadd.f32 0.0, %v528
    %530 = vmatmul.bf16.gmra.mxu0 %v430
    %v531 = vpop.f32.mrf.mxu0
    %v532 = vadd.f32 0.0, %v531
    %v533 = vpop.f32.mrf.mxu0
    %v534 = vadd.f32 0.0, %v533
    %535 = vmatmul.bf16.gmra.mxu0 %v431
    %v536 = vpop.f32.mrf.mxu0
    %v537 = vadd.f32 0.0, %v536
    %v538 = vpop.f32.mrf.mxu0
    %v539 = vadd.f32 0.0, %v538
    %540 = vmatmul.bf16.gmra.mxu0 %v432
    %v541 = vpop.f32.mrf.mxu0
    %v542 = vadd.f32 0.0, %v541
    %v543 = vpop.f32.mrf.mxu0
    %v544 = vadd.f32 0.0, %v543
    %545 = vdwg.mxu0
    %v546 = vpack.c.bf16 %v507, %v507
    %v547 = vpack.c.bf16 %v509, %v509
    %v548 = vpack.c.bf16 %v512, %v512
    %v549 = vpack.c.bf16 %v514, %v514
    %v550 = vpack.c.bf16 %v517, %v517
    %v551 = vpack.c.bf16 %v519, %v519
    %v552 = vpack.c.bf16 %v522, %v522
    %v553 = vpack.c.bf16 %v524, %v524
    %v554 = vpack.c.bf16 %v527, %v527
    %v555 = vpack.c.bf16 %v529, %v529
    %v556 = vpack.c.bf16 %v532, %v532
    %v557 = vpack.c.bf16 %v534, %v534
    %v558 = vpack.c.bf16 %v537, %v537
    %v559 = vpack.c.bf16 %v539, %v539
    %v560 = vpack.c.bf16 %v542, %v542
    %v561 = vpack.c.bf16 %v544, %v544
    %562 = vst [vmem:[%s5] sm:$0xf] %v546
    %563 = vst [vmem:[%s5 + $0x4] sm:$0xf] %v547
    %564 = vst [vmem:[%s5 + $0x8] sm:$0xf] %v548
    %565 = vst [vmem:[%s5 + $0xc] sm:$0xf] %v549
    %566 = vst [vmem:[%s5 + $0x10] sm:$0xf] %v550
    %567 = vst [vmem:[%s5 + $0x14] sm:$0xf] %v551
    %568 = vst [vmem:[%s5 + $0x18] sm:$0xf] %v552
    %569 = vst [vmem:[%s5 + $0x1c] sm:$0xf] %v553
    %570 = vst [vmem:[%s5 + $0x20] sm:$0xf] %v554
    %571 = vst [vmem:[%s5 + $0x24] sm:$0xf] %v555
    %572 = vst [vmem:[%s5 + $0x28] sm:$0xf] %v556
    %573 = vst [vmem:[%s5 + $0x2c] sm:$0xf] %v557
    %574 = vst [vmem:[%s5 + $0x30] sm:$0xf] %v558
    %575 = vst [vmem:[%s5 + $0x34] sm:$0xf] %v559
    %576 = vst [vmem:[%s5 + $0x38] sm:$0xf] %v560
    %577 = vst [vmem:[%s5 + $0x3c] sm:$0xf] %v561
  $region29: #{gcn_forward.2} parent=0 // pred_fallthru
    _
  // Predicated region
  $region30: #{gcn_forward.2} parent=0 // pred_check
    _
  $region31: #{gcn_forward.2} parent=0 // pred_check_branch
    %579 = sbr.rel (0) target = $region33
  $region32: #{gcn_forward.2} parent=0 // pred_region
    _
  $region33: #{gcn_forward.2} parent=0 // pred_fallthru
    _
  // Predicated region
  $region34: #{gcn_forward.2} parent=0 // pred_check
    _
  $region35: #{gcn_forward.2} parent=0 // pred_check_branch
    %581 = sbr.rel (0) target = $region37
  $region36: #{gcn_forward.2} parent=0 // pred_region
    _
  $region37: #{gcn_forward.2} parent=0 // pred_fallthru
    _

</llo_original>
